<compile_context>
chip_gen: v6e
topology: v6e:2x2x1
jax: 0.10.0
libtpu: 0.0.40
codegen_flags: <defaults>
</compile_context>

<pallas_src>
import jax
import jax.numpy as jnp
from jax.experimental import pallas as pl
from jax.experimental.pallas import tpu as pltpu

_LANE = 128                 # lane width (last block dim multiple)
_SUBLANE = 8                # sublane width (second-to-last block dim multiple)
_MAX_BLOCK_ROWS = 8192      # keeps double-buffered VMEM <= ~24 MiB (v7x-safe)
_PALLAS_MIN_BATCH = 16384   # below this, fused XLA beats a kernel launch


def _mlp_kernel(w0_ref, b0_ref, w1_ref, b1_ref, x_ref, o_ref):
    """One batch tile: x_ref (2, TBR, 128) f32 -> o_ref (TBR, 128) f32.

    Parameters live in SMEM, pre-scaled host-side so that
        out = b1' + sum_j w1'[j] * tanh(w0'[2j]*x0 + w0'[2j+1]*x1 + b0'[j])
    equals L1(sigmoid(L0(x))) exactly.
      w0_ref: (8,)  == 0.5 * L0.weight (4, 2) row-major
      b0_ref: (4,)  == 0.5 * L0.bias
      w1_ref: (4,)  == 0.5 * L1.weight (1, 4)
      b1_ref: (1,)  == L1.bias + 0.5 * sum(L1.weight)
    """
    x0 = x_ref[0]          # (TBR, 128) feature 0, sublane+lane dense
    x1 = x_ref[1]          # (TBR, 128) feature 1

    out = jnp.full(x0.shape, b1_ref[0], dtype=jnp.float32)
    # Unrolled hidden layer: 4 neurons, each 2 VPU FMAs + 1 EUP tanh, folded
    # straight into the single output neuron (no (4, TBR, 128) temporary).
    for j in range(4):
        z = w0_ref[2 * j] * x0 + w0_ref[2 * j + 1] * x1 + b0_ref[j]
        out = out + w1_ref[j] * jnp.tanh(z)

    o_ref[...] = out


def _reference_forward(x, w0, b0, w1, b1):
    """Pure-JAX reference matching PyTorch semantics (x @ W.T + b per layer)."""
    x = x.astype(jnp.float32)
    return jax.nn.sigmoid(x @ w0.T + b0) @ w1.T + b1


def net_forward(x, w0, b0, w1, b1, *, block_rows=2048, force_pallas=False):
    """Forward pass of `Net`: (B, 2) -> (B, 1) == sigmoid(x @ w0.T + b0) @ w1.T + b1.

    Args:
      x:  (B, 2) float inputs.
      w0: (4, 2) L0.weight (PyTorch layout), b0: (4,) L0.bias.
      w1: (1, 4) L1.weight,                  b1: (1,) L1.bias.
      block_rows: sublane rows per grid step (rounded to a multiple of 8,
        capped at 8192).  One step covers block_rows*128 examples; the default
        2048 rows = 256K examples = 2 MiB input / ~6 MiB double-buffered VMEM.
      force_pallas: skip the small-batch XLA fallback (used by the smoke test).
    """
    B = x.shape[0]
    if B < _PALLAS_MIN_BATCH and not force_pallas:
        # Kernel launch + relayout fixed costs dominate tiny batches.
        return _reference_forward(x, w0, b0, w1, b1)

    # --- host-side parameter folding (sigmoid -> tanh rewrite) ---
    w0p = (0.5 * w0).reshape(-1).astype(jnp.float32)                  # (8,)
    b0p = (0.5 * b0).reshape(-1).astype(jnp.float32)                  # (4,)
    w1p = (0.5 * w1).reshape(-1).astype(jnp.float32)                  # (4,)
    b1p = (b1.reshape(-1) + 0.5 * jnp.sum(w1)).astype(jnp.float32)    # (1,)

    # --- batch tiling: sublane (8) x lane (128) dense ---
    block_rows = int(block_rows)
    block_rows = max(_SUBLANE, min(_MAX_BLOCK_ROWS, (block_rows // _SUBLANE) * _SUBLANE))
    rows_needed = pl.cdiv(B, _LANE)
    if rows_needed <= block_rows:
        block_rows = max(_SUBLANE, pl.cdiv(rows_needed, _SUBLANE) * _SUBLANE)
    n_blocks = pl.cdiv(rows_needed, block_rows)
    rows = n_blocks * block_rows
    b_pad = rows * _LANE

    # Lane/sublane-dense relayout: (B, 2) -> (2, rows, 128).  Padded examples
    # are zeros; their outputs are computed and sliced off below.
    xt = (jnp.zeros((2, b_pad), jnp.float32)
          .at[:, :B].set(x.T.astype(jnp.float32))
          .reshape(2, rows, _LANE))

    smem_spec = pl.BlockSpec(memory_space=pltpu.MemorySpace.SMEM)

    out = pl.pallas_call(
        _mlp_kernel,
        out_shape=jax.ShapeDtypeStruct((rows, _LANE), jnp.float32),
        grid=(n_blocks,),
        in_specs=[
            smem_spec,  # w0'
            smem_spec,  # b0'
            smem_spec,  # w1'
            smem_spec,  # b1'
            pl.BlockSpec((2, block_rows, _LANE), lambda i: (0, i, 0)),
        ],
        out_specs=pl.BlockSpec((block_rows, _LANE), lambda i: (i, 0)),
        compiler_params=pltpu.CompilerParams(
            dimension_semantics=("parallel",),
            vmem_limit_bytes=64 * 1024 * 1024,
        ),
        cost_estimate=pl.CostEstimate(
            flops=24 * b_pad,           # 4 neurons * (2 FMA) + 4 output FMAs
            transcendentals=4 * b_pad,  # one tanh per hidden neuron
            bytes_accessed=12 * b_pad,  # 8 B in + 4 B out per example
        ),
    )(w0p, b0p, w1p, b1p, xt)

    # Back to the PyTorch (B, 1) layout (metadata reshape + tiny tail slice).
    return out.reshape(-1)[:B].reshape(B, 1)


def init_params(key):
    """Deterministic init mimicking PyTorch's uniform(-1/sqrt(fan_in), ...)."""
    k0w, k0b, k1w, k1b = jax.random.split(key, 4)
    bound0 = 1.0 / jnp.sqrt(2.0)  # L0: in_features = 2
    bound1 = 1.0 / jnp.sqrt(4.0)  # L1: in_features = 4
    # Stored in PyTorch layout (out_features, in_features).
    w0 = jax.random.uniform(k0w, (4, 2), jnp.float32, -bound0, bound0)
    b0 = jax.random.uniform(k0b, (4,), jnp.float32, -bound0, bound0)
    w1 = jax.random.uniform(k1w, (1, 4), jnp.float32, -bound1, bound1)
    b1 = jax.random.uniform(k1b, (1,), jnp.float32, -bound1, bound1)
    return w0, b0, w1, b1


if __name__ == "__main__":
    key = jax.random.PRNGKey(0)
    kx1, kx2, kp = jax.random.split(key, 3)

    w0, b0, w1, b1 = init_params(kp)

    # Case 1: tiny batch, single grid step (force the Pallas path).
    B1 = 8
    x1 = jax.random.normal(kx1, (B1, 2), jnp.float32)
    out1 = jax.block_until_ready(net_forward(x1, w0, b0, w1, b1, force_pallas=True))
    ref1 = _reference_forward(x1, w0, b0, w1, b1)
    assert out1.shape == (B1, 1), out1.shape
    assert jnp.allclose(out1, ref1, atol=1e-5, rtol=1e-5), "mismatch vs reference (case 1)"

    # Case 2: ragged batch with a multi-step grid (small block_rows so the
    # pipelined / megacore-sharded path is exercised without a huge batch).
    B2 = 3000
    x2 = jax.random.normal(kx2, (B2, 2), jnp.float32)
    out2 = jax.block_until_ready(
        net_forward(x2, w0, b0, w1, b1, block_rows=8, force_pallas=True))
    ref2 = _reference_forward(x2, w0, b0, w1, b1)
    assert out2.shape == (B2, 1), out2.shape
    assert jnp.allclose(out2, ref2, atol=1e-5, rtol=1e-5), "mismatch vs reference (case 2)"

    print("KERNEL_OK")
</pallas_src>

<mosaic_0001>
module attributes {stable_mosaic.version = 11 : i64} {
  func.func @_mlp_kernel(%arg0: i32, %arg1: memref<8xf32, #tpu.memory_space<smem>>, %arg2: memref<4xf32, #tpu.memory_space<smem>>, %arg3: memref<4xf32, #tpu.memory_space<smem>>, %arg4: memref<1xf32, #tpu.memory_space<smem>>, %arg5: memref<2x8x128xf32, #tpu.memory_space<vmem>>, %arg6: memref<8x128xf32, #tpu.memory_space<vmem>>) attributes {dimension_semantics = [#tpu.dimension_semantics<parallel>], iteration_bounds = array<i64: 1>, scalar_prefetch = 0 : i64, scratch_operands = 0 : i64, tpu.core_type = #tpu.core_type<tc>, window_params = [{transform_indices = @transform_0, window_bounds = array<i64: 8>}, {transform_indices = @transform_1, window_bounds = array<i64: 4>}, {transform_indices = @transform_2, window_bounds = array<i64: 4>}, {transform_indices = @transform_3, window_bounds = array<i64: 1>}, {transform_indices = @transform_4, window_bounds = array<i64: 2, 8, 128>}, {transform_indices = @transform_5, window_bounds = array<i64: 8, 128>}]} {
    %c0 = arith.constant 0 : index
    %c0_0 = arith.constant 0 : index
    %c0_1 = arith.constant 0 : index
    %0 = vector.load %arg5[%c0, %c0_0, %c0_1] : memref<2x8x128xf32, #tpu.memory_space<vmem>>, vector<1x8x128xf32>
    %1 = vector.shape_cast %0 : vector<1x8x128xf32> to vector<8x128xf32>
    %c1 = arith.constant 1 : index
    %c0_2 = arith.constant 0 : index
    %c0_3 = arith.constant 0 : index
    %2 = vector.load %arg5[%c1, %c0_2, %c0_3] : memref<2x8x128xf32, #tpu.memory_space<vmem>>, vector<1x8x128xf32>
    %3 = vector.shape_cast %2 : vector<1x8x128xf32> to vector<8x128xf32>
    %c0_4 = arith.constant 0 : index
    %4 = memref.load %arg4[%c0_4] : memref<1xf32, #tpu.memory_space<smem>>
    %5 = vector.broadcast %4 : f32 to vector<8x128xf32>
    %c0_5 = arith.constant 0 : index
    %6 = memref.load %arg1[%c0_5] : memref<8xf32, #tpu.memory_space<smem>>
    %7 = vector.broadcast %6 : f32 to vector<8x128xf32>
    %8 = arith.mulf %7, %1 : vector<8x128xf32>
    %c1_6 = arith.constant 1 : index
    %9 = memref.load %arg1[%c1_6] : memref<8xf32, #tpu.memory_space<smem>>
    %10 = vector.broadcast %9 : f32 to vector<8x128xf32>
    %11 = arith.mulf %10, %3 : vector<8x128xf32>
    %12 = arith.addf %8, %11 : vector<8x128xf32>
    %c0_7 = arith.constant 0 : index
    %13 = memref.load %arg2[%c0_7] : memref<4xf32, #tpu.memory_space<smem>>
    %14 = vector.broadcast %13 : f32 to vector<8x128xf32>
    %15 = arith.addf %12, %14 : vector<8x128xf32>
    %c0_8 = arith.constant 0 : index
    %16 = memref.load %arg3[%c0_8] : memref<4xf32, #tpu.memory_space<smem>>
    %17 = math.tanh %15 : vector<8x128xf32>
    %18 = vector.broadcast %16 : f32 to vector<8x128xf32>
    %19 = arith.mulf %18, %17 : vector<8x128xf32>
    %20 = arith.addf %5, %19 : vector<8x128xf32>
    %c2 = arith.constant 2 : index
    %21 = memref.load %arg1[%c2] : memref<8xf32, #tpu.memory_space<smem>>
    %22 = vector.broadcast %21 : f32 to vector<8x128xf32>
    %23 = arith.mulf %22, %1 : vector<8x128xf32>
    %c3 = arith.constant 3 : index
    %24 = memref.load %arg1[%c3] : memref<8xf32, #tpu.memory_space<smem>>
    %25 = vector.broadcast %24 : f32 to vector<8x128xf32>
    %26 = arith.mulf %25, %3 : vector<8x128xf32>
    %27 = arith.addf %23, %26 : vector<8x128xf32>
    %c1_9 = arith.constant 1 : index
    %28 = memref.load %arg2[%c1_9] : memref<4xf32, #tpu.memory_space<smem>>
    %29 = vector.broadcast %28 : f32 to vector<8x128xf32>
    %30 = arith.addf %27, %29 : vector<8x128xf32>
    %c1_10 = arith.constant 1 : index
    %31 = memref.load %arg3[%c1_10] : memref<4xf32, #tpu.memory_space<smem>>
    %32 = math.tanh %30 : vector<8x128xf32>
    %33 = vector.broadcast %31 : f32 to vector<8x128xf32>
    %34 = arith.mulf %33, %32 : vector<8x128xf32>
    %35 = arith.addf %20, %34 : vector<8x128xf32>
    %c4 = arith.constant 4 : index
    %36 = memref.load %arg1[%c4] : memref<8xf32, #tpu.memory_space<smem>>
    %37 = vector.broadcast %36 : f32 to vector<8x128xf32>
    %38 = arith.mulf %37, %1 : vector<8x128xf32>
    %c5 = arith.constant 5 : index
    %39 = memref.load %arg1[%c5] : memref<8xf32, #tpu.memory_space<smem>>
    %40 = vector.broadcast %39 : f32 to vector<8x128xf32>
    %41 = arith.mulf %40, %3 : vector<8x128xf32>
    %42 = arith.addf %38, %41 : vector<8x128xf32>
    %c2_11 = arith.constant 2 : index
    %43 = memref.load %arg2[%c2_11] : memref<4xf32, #tpu.memory_space<smem>>
    %44 = vector.broadcast %43 : f32 to vector<8x128xf32>
    %45 = arith.addf %42, %44 : vector<8x128xf32>
    %c2_12 = arith.constant 2 : index
    %46 = memref.load %arg3[%c2_12] : memref<4xf32, #tpu.memory_space<smem>>
    %47 = math.tanh %45 : vector<8x128xf32>
    %48 = vector.broadcast %46 : f32 to vector<8x128xf32>
    %49 = arith.mulf %48, %47 : vector<8x128xf32>
    %50 = arith.addf %35, %49 : vector<8x128xf32>
    %c6 = arith.constant 6 : index
    %51 = memref.load %arg1[%c6] : memref<8xf32, #tpu.memory_space<smem>>
    %52 = vector.broadcast %51 : f32 to vector<8x128xf32>
    %53 = arith.mulf %52, %1 : vector<8x128xf32>
    %c7 = arith.constant 7 : index
    %54 = memref.load %arg1[%c7] : memref<8xf32, #tpu.memory_space<smem>>
    %55 = vector.broadcast %54 : f32 to vector<8x128xf32>
    %56 = arith.mulf %55, %3 : vector<8x128xf32>
    %57 = arith.addf %53, %56 : vector<8x128xf32>
    %c3_13 = arith.constant 3 : index
    %58 = memref.load %arg2[%c3_13] : memref<4xf32, #tpu.memory_space<smem>>
    %59 = vector.broadcast %58 : f32 to vector<8x128xf32>
    %60 = arith.addf %57, %59 : vector<8x128xf32>
    %c3_14 = arith.constant 3 : index
    %61 = memref.load %arg3[%c3_14] : memref<4xf32, #tpu.memory_space<smem>>
    %62 = math.tanh %60 : vector<8x128xf32>
    %63 = vector.broadcast %61 : f32 to vector<8x128xf32>
    %64 = arith.mulf %63, %62 : vector<8x128xf32>
    %65 = arith.addf %50, %64 : vector<8x128xf32>
    %c0_15 = arith.constant 0 : index
    %c0_16 = arith.constant 0 : index
    %66 = vector.load %arg6[%c0_15, %c0_16] : memref<8x128xf32, #tpu.memory_space<vmem>>, vector<8x128xf32>
    tpu.vector_store %arg6[%c0_15, %c0_16], %65 {strides = array<i32>} : memref<8x128xf32, #tpu.memory_space<vmem>>, vector<8x128xf32>,
    return
  }
  func.func @transform_0(%arg0: i32) -> i32 {
    %c0_i32 = arith.constant 0 : i32
    %c0_i32_0 = arith.constant 0 : i32
    return %c0_i32 : i32
  }
  func.func @transform_1(%arg0: i32) -> i32 {
    %c0_i32 = arith.constant 0 : i32
    %c0_i32_0 = arith.constant 0 : i32
    return %c0_i32 : i32
  }
  func.func @transform_2(%arg0: i32) -> i32 {
    %c0_i32 = arith.constant 0 : i32
    %c0_i32_0 = arith.constant 0 : i32
    return %c0_i32 : i32
  }
  func.func @transform_3(%arg0: i32) -> i32 {
    %c0_i32 = arith.constant 0 : i32
    %c0_i32_0 = arith.constant 0 : i32
    return %c0_i32 : i32
  }
  func.func @transform_4(%arg0: i32) -> (i32, i32, i32) {
    %c0_i32 = arith.constant 0 : i32
    %c0_i32_0 = arith.constant 0 : i32
    %c0_i32_1 = arith.constant 0 : i32
    return %c0_i32, %arg0, %c0_i32_0 : i32, i32, i32
  }
  func.func @transform_5(%arg0: i32) -> (i32, i32) {
    %c0_i32 = arith.constant 0 : i32
    %c0_i32_0 = arith.constant 0 : i32
    return %arg0, %c0_i32 : i32, i32
  }
}

</mosaic_0001>

<llo_original>
// kernel: tpu_custom_call.1
$region0: #{tpu_custom_call.1}
  #allocation0 [shape = 'u32[]', space=smem, size = 0x4, offset = 0x4, fixed_abs, tag = 'smem constant byte address 0x4 - core index']
  #allocation1 [shape = 'u32[144,128]{1,0:T(1,128)}', space=vmem, size = 0x12000, scoped, tag = 'internal scratch']
  #allocation2 [shape = 'f32[1]{0:T(128)S(6)}', space=smem, size = 0x200, scoped, tag = 'scoped memory for tpu_custom_call.1']
  %s0 = inlined_call_operand.vmem [shape: f32[8], index: 0, kind: input, shape index: {}]
  %s1 = inlined_call_operand.vmem [shape: f32[4], index: 1, kind: input, shape index: {}]
  %s2 = inlined_call_operand.vmem [shape: f32[4], index: 2, kind: input, shape index: {}]
  %s3 = inlined_call_operand.<no memory space> [shape: f32[1], index: 3, kind: input, shape index: {}]
  %s4 = inlined_call_operand.hbm [shape: f32[2,8,128], index: 4, kind: input, shape index: {}]
  %s5 = inlined_call_operand.hbm [shape: f32[8,128], index: 5, kind: output, shape index: {}]
  %s6 = sld [smem:[#allocation0]]
  $region46: #{tpu_custom_call.1} parent=0
    _
  %s8 = ssub.s32 1, %s6
  %s9 = scalar_select 0, %s8, %s6
  %10 = sst [smem:[#allocation2]] %s3
  $region1: #{tpu_custom_call.1} parent=0
    #allocation3 [shape = 'u8[512]{0}', space=smem, size = 0x200, scoped, tag = 'input window, operand 0, single buffered']
    #allocation4 [shape = 's32[1]{0}', space=sflag, size = 0x4, scoped, tag = 'scoped memory for tpu_custom_call.1']
    #allocation5 [shape = 's32[1]{0}', space=sflag, size = 0x4, scoped, tag = 'scoped memory for tpu_custom_call.1']
    #allocation6 [shape = 's32[1]{0}', space=sflag, size = 0x4, scoped, tag = 'scoped memory for tpu_custom_call.1']
    #allocation7 [shape = 'u8[512]{0}', space=smem, size = 0x200, scoped, tag = 'input window, operand 1, single buffered']
    #allocation8 [shape = 's32[1]{0}', space=sflag, size = 0x4, scoped, tag = 'scoped memory for tpu_custom_call.1']
    #allocation9 [shape = 'u8[512]{0}', space=smem, size = 0x200, scoped, tag = 'input window, operand 2, single buffered']
    #allocation10 [shape = 'u8[8192]{0}', space=vmem, size = 0x2000, scoped, tag = 'input window, operand 4, single buffered']
    #allocation11 [shape = 'u8[4096]{0}', space=vmem, size = 0x1000, scoped, tag = 'output window, operand 0, single buffered']
    %11 = vsyncpa [#allocation6], 0
    %12 = vsyncpa [#allocation8], 0
    %13 = vsyncpa [#allocation4], 0
    %14 = vsyncpa [#allocation5], 0
    // Predicated region
    $region2: #{tpu_custom_call.1} parent=1 // pred_check
      _
    $region3: #{tpu_custom_call.1} parent=1 // pred_check_branch
      %16 = sbr.rel (0) target = $region5
    $region4: #{tpu_custom_call.1} parent=1 // pred_region
      %s18 = ssub.s32 16, 16
      %19 = vsyncadd [#allocation6], %s18
      %s21 = sshll.u32 %s0, 4
      %s22 = int_to_ptr.vmem [resolvable:$true] %s21
      %24 = dma.vmem_to_smem %s22, 16, [#allocation3], [#allocation6]
    $region5: #{tpu_custom_call.1} parent=1 // pred_fallthru
      _
    // Predicated region
    $region6: #{tpu_custom_call.1} parent=1 // pred_check
      _
    $region7: #{tpu_custom_call.1} parent=1 // pred_check_branch
      %26 = sbr.rel (0) target = $region9
    $region8: #{tpu_custom_call.1} parent=1 // pred_region
      %s28 = ssub.s32 16, 16
      %29 = vsyncadd [#allocation8], %s28
      %s31 = sshll.u32 %s1, 4
      %s32 = int_to_ptr.vmem [resolvable:$true] %s31
      %34 = dma.vmem_to_smem %s32, 16, [#allocation7], [#allocation8]
    $region9: #{tpu_custom_call.1} parent=1 // pred_fallthru
      _
    // Predicated region
    $region10: #{tpu_custom_call.1} parent=1 // pred_check
      _
    $region11: #{tpu_custom_call.1} parent=1 // pred_check_branch
      %36 = sbr.rel (0) target = $region13
    $region12: #{tpu_custom_call.1} parent=1 // pred_region
      %s38 = ssub.s32 16, 16
      %39 = vsyncadd [#allocation8], %s38
      %s41 = sshll.u32 %s2, 4
      %s42 = int_to_ptr.vmem [resolvable:$true] %s41
      %44 = dma.vmem_to_smem %s42, 16, [#allocation9], [#allocation8]
    $region13: #{tpu_custom_call.1} parent=1 // pred_fallthru
      _
    // Predicated region
    $region14: #{tpu_custom_call.1} parent=1 // pred_check
      _
    $region15: #{tpu_custom_call.1} parent=1 // pred_check_branch
      %46 = sbr.rel (0) target = $region17
    $region16: #{tpu_custom_call.1} parent=1 // pred_region
      _
    $region17: #{tpu_custom_call.1} parent=1 // pred_fallthru
      _
    // Predicated region
    $region18: #{tpu_custom_call.1} parent=1 // pred_check
      _
    $region19: #{tpu_custom_call.1} parent=1 // pred_check_branch
      %48 = sbr.rel (0) target = $region21
    $region20: #{tpu_custom_call.1} parent=1 // pred_region
      %s50 = ssub.s32 256, 256
      %51 = vsyncadd [#allocation4], %s50
      %s52 = sshll.u32 [#allocation10], 4
      %s53 = int_to_ptr.vmem [resolvable:$true] %s52
      %58 = dma.hbm_to_vmem [thread:$0]  %s4, 256, %s53, [#allocation4], 128, 128, 8
    $region21: #{tpu_custom_call.1} parent=1 // pred_fallthru
      _
    // Predicated region
    $region22: #{tpu_custom_call.1} parent=1 // pred_check
      _
    $region23: #{tpu_custom_call.1} parent=1 // pred_check_branch
      %60 = sbr.rel (0) target = $region25
    $region24: #{tpu_custom_call.1} parent=1 // pred_region
      %61 = dma.done [#allocation6], 16
    $region25: #{tpu_custom_call.1} parent=1 // pred_fallthru
      _
    // Predicated region
    $region26: #{tpu_custom_call.1} parent=1 // pred_check
      _
    $region27: #{tpu_custom_call.1} parent=1 // pred_check_branch
      %63 = sbr.rel (0) target = $region29
    $region28: #{tpu_custom_call.1} parent=1 // pred_region
      %64 = dma.done [#allocation8], 16
    $region29: #{tpu_custom_call.1} parent=1 // pred_fallthru
      _
    // Predicated region
    $region30: #{tpu_custom_call.1} parent=1 // pred_check
      _
    $region31: #{tpu_custom_call.1} parent=1 // pred_check_branch
      %66 = sbr.rel (0) target = $region33
    $region32: #{tpu_custom_call.1} parent=1 // pred_region
      %67 = dma.done [#allocation8], 16
    $region33: #{tpu_custom_call.1} parent=1 // pred_fallthru
      _
    // Predicated region
    $region34: #{tpu_custom_call.1} parent=1 // pred_check
      _
    $region35: #{tpu_custom_call.1} parent=1 // pred_check_branch
      %69 = sbr.rel (0) target = $region37
    $region36: #{tpu_custom_call.1} parent=1 // pred_region
      %70 = dma.done [#allocation4], 256
    $region37: #{tpu_custom_call.1} parent=1 // pred_fallthru
      _
    %71 = sfence
    %v72 = vld [vmem:[#allocation10] sm:$0xff]
    %s73 = scalar_lea.vmem [#allocation10], 8
    %v74 = vld [vmem:[%s73] sm:$0xff]
    %s75 = sld [smem:[#allocation2]]
    %v76 = vstv %s75
    %s77 = sld [smem:[#allocation3]]
    %v78 = vstv %s77
    %v79 = vmul.f32 %v78, %v72
    %s80 = sld [smem:[#allocation3 + $0x1]]
    %v81 = vstv %s80
    %v82 = vmul.f32 %v81, %v74
    %v83 = vadd.f32 %v79, %v82
    %s84 = sld [smem:[#allocation7]]
    %v85 = vstv %s84
    %v86 = vadd.f32 %v83, %v85
    %s87 = sld [smem:[#allocation9]]
    %v88 = vtanh.pop %v86
    %v89 = vstv %s87
    %v90 = vmul.f32 %v89, %v88
    %v91 = vadd.f32 %v76, %v90
    %s92 = sld [smem:[#allocation3 + $0x2]]
    %v93 = vstv %s92
    %v94 = vmul.f32 %v93, %v72
    %s95 = sld [smem:[#allocation3 + $0x3]]
    %v96 = vstv %s95
    %v97 = vmul.f32 %v96, %v74
    %v98 = vadd.f32 %v94, %v97
    %s99 = sld [smem:[#allocation7 + $0x1]]
    %v100 = vstv %s99
    %v101 = vadd.f32 %v98, %v100
    %s102 = sld [smem:[#allocation9 + $0x1]]
    %v103 = vtanh.pop %v101
    %v104 = vstv %s102
    %v105 = vmul.f32 %v104, %v103
    %v106 = vadd.f32 %v91, %v105
    %s107 = sld [smem:[#allocation3 + $0x4]]
    %v108 = vstv %s107
    %v109 = vmul.f32 %v108, %v72
    %s110 = sld [smem:[#allocation3 + $0x5]]
    %v111 = vstv %s110
    %v112 = vmul.f32 %v111, %v74
    %v113 = vadd.f32 %v109, %v112
    %s114 = sld [smem:[#allocation7 + $0x2]]
    %v115 = vstv %s114
    %v116 = vadd.f32 %v113, %v115
    %s117 = sld [smem:[#allocation9 + $0x2]]
    %v118 = vtanh.pop %v116
    %v119 = vstv %s117
    %v120 = vmul.f32 %v119, %v118
    %v121 = vadd.f32 %v106, %v120
    %s122 = sld [smem:[#allocation3 + $0x6]]
    %v123 = vstv %s122
    %v124 = vmul.f32 %v123, %v72
    %s125 = sld [smem:[#allocation3 + $0x7]]
    %v126 = vstv %s125
    %v127 = vmul.f32 %v126, %v74
    %v128 = vadd.f32 %v124, %v127
    %s129 = sld [smem:[#allocation7 + $0x3]]
    %v130 = vstv %s129
    %v131 = vadd.f32 %v128, %v130
    %s132 = sld [smem:[#allocation9 + $0x3]]
    %v133 = vtanh.pop %v131
    %v134 = vstv %s132
    %v135 = vmul.f32 %v134, %v133
    %v136 = vadd.f32 %v121, %v135
    %137 = vst [vmem:[#allocation11] sm:$0xff] %v136
    // Predicated region
    $region38: #{tpu_custom_call.1} parent=1 // pred_check
      _
    $region39: #{tpu_custom_call.1} parent=1 // pred_check_branch
      %139 = sbr.rel (0) target = $region41
    $region40: #{tpu_custom_call.1} parent=1 // pred_region
      %s141 = ssub.s32 128, 128
      %142 = vsyncadd [#allocation5], %s141
      %s144 = sshll.u32 [#allocation11], 4
      %s145 = int_to_ptr.vmem [resolvable:$true] %s144
      %147 = dma.vmem_to_hbm [thread:$0]  %s145, 128, %s5, [#allocation5]
    $region41: #{tpu_custom_call.1} parent=1 // pred_fallthru
      _
    // Predicated region
    $region42: #{tpu_custom_call.1} parent=1 // pred_check
      _
    $region43: #{tpu_custom_call.1} parent=1 // pred_check_branch
      %149 = sbr.rel (0) target = $region45
    $region44: #{tpu_custom_call.1} parent=1 // pred_region
      %150 = dma.done [#allocation5], 128
    $region45: #{tpu_custom_call.1} parent=1 // pred_fallthru
      _
    %151 = vsyncpa [#allocation4], 1
    %152 = vsyncpa [#allocation5], 1
    %153 = vsyncpa [#allocation6], 1
    %154 = vsyncpa [#allocation8], 1

</llo_original>
